<compile_context>
chip_gen: v5e
topology: v5e:2x2
jax: 0.10.0
libtpu: 0.0.40
codegen_flags: <defaults>
</compile_context>

<pallas_src>
import functools

import jax
import jax.numpy as jnp
from jax import lax
from jax.experimental import pallas as pl
from jax.experimental.pallas import tpu as pltpu


def _upsample_kernel(x_ref, ew_ref, o_ref, *, s, precision, compute_dtype):
    """One row-tile: W-expand via tiny 0/1 matmul, H-expand via s lane-offset stores."""
    # Column (W) expansion: (bm, W) @ (W, s*W) -> (bm, s*W).  Ew is a 0/1
    # duplication matrix so every output element is exactly one input element.
    t = jnp.dot(x_ref[...].astype(compute_dtype), ew_ref[...],
                precision=precision, preferred_element_type=jnp.float32)
    t = t.astype(o_ref.dtype)
    sW = t.shape[-1]
    # Row (H) expansion: in the merged (N*C*H, s*s*W) output view the s copies
    # of a source row are contiguous on the lane axis -> s plain full-width
    # stores at static offsets.  Pure data movement, no MXU, no sublane scatter.
    for i in range(s):
        o_ref[:, i * sW:(i + 1) * sW] = t


def _choose_row_tile(M, W, s, itemsize, budget_bytes=8 * 1024 * 1024):
    """Largest multiple-of-8 divisor of M (<= 512) whose per-step set fits VMEM budget."""
    sW = s * W

    def step_bytes(bm):
        return (2 * bm * W * itemsize          # input block, double buffered
                + 2 * bm * s * sW * itemsize   # output block, double buffered
                + W * sW * 4                   # resident Ew selector
                + 2 * bm * sW * 4)             # f32 intermediate headroom

    best = None
    d = 8
    while d <= min(M, 512):
        if M % d == 0 and step_bytes(d) <= budget_bytes:
            best = d
        d += 8
    if best is None:
        best = M   # tiny or oddly-factored M: one block over the whole row axis
    return best


@functools.partial(jax.jit, static_argnames=("scale",))
def upsample_nearest(x, scale: int = 2):
    """Equivalent of nn.Upsample(scale_factor=scale, mode='nearest') on NCHW x."""
    N, C, H, W = x.shape
    s = int(scale)
    if s == 1:
        return x
    dtype = x.dtype
    if not jnp.issubdtype(dtype, jnp.floating):
        # TODO(synk): integer/bool nearest-upsample needs a non-MXU duplication
        # path (v7x MXU has no int support); only float dtypes are handled here.
        raise NotImplementedError("upsample_nearest: floating dtypes only")

    if dtype == jnp.bfloat16:
        compute_dtype, precision = jnp.bfloat16, lax.Precision.DEFAULT  # already exact
    else:
        compute_dtype, precision = jnp.float32, lax.Precision.HIGHEST   # exact for f32

    M = N * C * H
    sW = s * W
    itemsize = dtype.itemsize
    bm = _choose_row_tile(M, W, s, itemsize)

    # 0/1 column-duplication matrix: ew[w, j] = 1 iff w == j // s.
    ew = (jnp.arange(W, dtype=jnp.int32)[:, None]
          == (jnp.arange(sW, dtype=jnp.int32)[None, :] // s)).astype(compute_dtype)

    x2 = x.reshape(M, W)   # free: merges contiguous leading dims (N, C, H)

    kernel = functools.partial(_upsample_kernel, s=s, precision=precision,
                               compute_dtype=compute_dtype)

    cost = pl.CostEstimate(
        flops=2 * M * W * sW,                               # tiny Ew matmul only
        transcendentals=0,
        bytes_accessed=(1 + s * s) * M * W * itemsize)      # mem-bound op

    out2 = pl.pallas_call(
        kernel,
        out_shape=jax.ShapeDtypeStruct((M, s * sW), dtype),
        grid=(M // bm,),
        in_specs=[
            pl.BlockSpec((bm, W), lambda i: (i, 0)),        # row tile of the image
            pl.BlockSpec((W, sW), lambda i: (0, 0)),        # Ew, resident across grid
        ],
        out_specs=pl.BlockSpec((bm, s * sW), lambda i: (i, 0)),
        compiler_params=pltpu.CompilerParams(
            dimension_semantics=("parallel",),              # megacore-shardable even for N=1
            vmem_limit_bytes=32 * 1024 * 1024),
        cost_estimate=cost,
    )(x2, ew)

    # Free contiguous reshape: (N*C*H, s*s*W) -> (N, C, s*H, s*W).
    return out2.reshape(N, C, s * H, s * W)


if __name__ == "__main__":
    key = jax.random.PRNGKey(0)
    N, C, H, W = 2, 4, 16, 16           # small NCHW input; UpSample() defaults: s=2, nearest
    x = jax.random.normal(key, (N, C, H, W), jnp.float32)

    y = upsample_nearest(x, scale=2)
    jax.block_until_ready(y)

    # Independent nearest-neighbour reference.
    ref = jnp.repeat(jnp.repeat(x, 2, axis=2), 2, axis=3)
    assert y.shape == (N, C, 2 * H, 2 * W)
    assert bool(jnp.allclose(y, ref, rtol=1e-6, atol=1e-6))
    print("KERNEL_OK")
</pallas_src>

<mosaic_0001>
module attributes {stable_mosaic.version = 11 : i64} {
  func.func @_upsample_kernel(%arg0: i32, %arg1: memref<128x16xf32, #tpu.memory_space<vmem>>, %arg2: memref<16x32xf32, #tpu.memory_space<vmem>>, %arg3: memref<128x64xf32, #tpu.memory_space<vmem>>) attributes {dimension_semantics = [#tpu.dimension_semantics<parallel>], iteration_bounds = array<i64: 1>, scalar_prefetch = 0 : i64, scratch_operands = 0 : i64, tpu.core_type = #tpu.core_type<tc>, window_params = [{transform_indices = @transform_0, window_bounds = array<i64: 128, 16>}, {pipeline_mode = #tpu.pipeline_mode<synchronous>, transform_indices = @transform_1, window_bounds = array<i64: 16, 32>}, {transform_indices = @transform_2, window_bounds = array<i64: 128, 64>}]} {
    %c0 = arith.constant 0 : index
    %c0_0 = arith.constant 0 : index
    %0 = vector.load %arg1[%c0, %c0_0] : memref<128x16xf32, #tpu.memory_space<vmem>>, vector<128x16xf32>
    %c0_1 = arith.constant 0 : index
    %c0_2 = arith.constant 0 : index
    %1 = vector.load %arg2[%c0_1, %c0_2] : memref<16x32xf32, #tpu.memory_space<vmem>>, vector<16x32xf32>
    %cst = arith.constant dense<0.000000e+00> : vector<128x32xf32>
    %2 = tpu.matmul %0, %1, %cst {dimension_numbers = #tpu.dot_dimension_numbers<[1], [0], [0], [1], [0, 0, 1, 1], [], []>, precision = #tpu.contract_precision<fp32>} : vector<128x16xf32>, vector<16x32xf32>, vector<128x32xf32> -> vector<128x32xf32>
    %c0_3 = arith.constant 0 : index
    %c0_4 = arith.constant 0 : index
    %3 = vector.load %arg3[%c0_3, %c0_4] : memref<128x64xf32, #tpu.memory_space<vmem>>, vector<128x32xf32>
    tpu.vector_store %arg3[%c0_3, %c0_4], %2 {strides = array<i32>} : memref<128x64xf32, #tpu.memory_space<vmem>>, vector<128x32xf32>,
    %c0_5 = arith.constant 0 : index
    %c32 = arith.constant 32 : index
    %4 = vector.load %arg3[%c0_5, %c32] : memref<128x64xf32, #tpu.memory_space<vmem>>, vector<128x32xf32>
    tpu.vector_store %arg3[%c0_5, %c32], %2 {strides = array<i32>} : memref<128x64xf32, #tpu.memory_space<vmem>>, vector<128x32xf32>,
    return
  }
  func.func @transform_0(%arg0: i32) -> (i32, i32) {
    %c0_i32 = arith.constant 0 : i32
    %c0_i32_0 = arith.constant 0 : i32
    return %arg0, %c0_i32 : i32, i32
  }
  func.func @transform_1(%arg0: i32) -> (i32, i32) {
    %c0_i32 = arith.constant 0 : i32
    %c0_i32_0 = arith.constant 0 : i32
    %c0_i32_1 = arith.constant 0 : i32
    return %c0_i32, %c0_i32_0 : i32, i32
  }
  func.func @transform_2(%arg0: i32) -> (i32, i32) {
    %c0_i32 = arith.constant 0 : i32
    %c0_i32_0 = arith.constant 0 : i32
    return %arg0, %c0_i32 : i32, i32
  }
}

</mosaic_0001>

<llo_original>
// kernel: upsample_nearest.1
$region0: #{upsample_nearest.1}
  #allocation0 [shape = 'u32[]', space=smem, size = 0x4, offset = 0x4, fixed_abs, tag = 'smem constant byte address 0x4 - core index']
  #allocation1 [shape = 'u32[72,128]{1,0:T(1,128)}', space=vmem, size = 0x9000, scoped, tag = 'internal scratch']
  %s0 = inlined_call_operand.hbm [shape: f32[128,16], index: 0, kind: input, shape index: {}]
  %s1 = inlined_call_operand.vmem [shape: f32[16,32], index: 1, kind: input, shape index: {}]
  %s2 = inlined_call_operand.vmem [shape: f32[128,64], index: 2, kind: output, shape index: {}]
  %s3 = sld [smem:[#allocation0]]
  $region22: #{upsample_nearest.1} parent=0
    _
  %s5 = ssub.s32 1, %s3
  %s6 = scalar_select 0, %s5, %s3
  $region1: #{upsample_nearest.1} parent=0
    #allocation2 [shape = 'u8[65536]{0}', space=vmem, size = 0x10000, scoped, tag = 'input window, operand 0, single buffered']
    #allocation3 [shape = 's32[1]{0}', space=sflag, size = 0x4, scoped, tag = 'scoped memory for upsample_nearest.1']
    %7 = vsyncpa [#allocation3], 0
    // Predicated region
    $region2: #{upsample_nearest.1} parent=1 // pred_check
      _
    $region3: #{upsample_nearest.1} parent=1 // pred_check_branch
      %9 = sbr.rel (0) target = $region5
    $region4: #{upsample_nearest.1} parent=1 // pred_region
      %11 = vsyncadd [#allocation3], 0
      %s12 = sshll.u32 %s0, 4
      %s13 = int_to_ptr.hbm [resolvable:$true] %s12
      %s14 = sshll.u32 [#allocation2], 4
      %s15 = int_to_ptr.vmem [resolvable:$true] %s14
      %20 = dma.hbm_to_vmem [thread:$0]  %s13, 2048, %s15, [#allocation3], 128, 128, 8
    $region5: #{upsample_nearest.1} parent=1 // pred_fallthru
      _
    // Predicated region
    $region6: #{upsample_nearest.1} parent=1 // pred_check
      _
    $region7: #{upsample_nearest.1} parent=1 // pred_check_branch
      %22 = sbr.rel (0) target = $region9
    $region8: #{upsample_nearest.1} parent=1 // pred_region
      _
    $region9: #{upsample_nearest.1} parent=1 // pred_fallthru
      _
    // Predicated region
    $region10: #{upsample_nearest.1} parent=1 // pred_check
      _
    $region11: #{upsample_nearest.1} parent=1 // pred_check_branch
      %24 = sbr.rel (0) target = $region13
    $region12: #{upsample_nearest.1} parent=1 // pred_region
      %26 = dma.done [#allocation3], 2048
    $region13: #{upsample_nearest.1} parent=1 // pred_fallthru
      _
    %v27 = vld [vmem:[#allocation2] sm:$0xff]
    %v28 = vld [vmem:[#allocation2 + $0x8] sm:$0xff]
    %v29 = vld [vmem:[#allocation2 + $0x10] sm:$0xff]
    %v30 = vld [vmem:[#allocation2 + $0x18] sm:$0xff]
    %v31 = vld [vmem:[#allocation2 + $0x20] sm:$0xff]
    %v32 = vld [vmem:[#allocation2 + $0x28] sm:$0xff]
    %v33 = vld [vmem:[#allocation2 + $0x30] sm:$0xff]
    %v34 = vld [vmem:[#allocation2 + $0x38] sm:$0xff]
    %v35 = vld [vmem:[#allocation2 + $0x40] sm:$0xff]
    %v36 = vld [vmem:[#allocation2 + $0x48] sm:$0xff]
    %v37 = vld [vmem:[#allocation2 + $0x50] sm:$0xff]
    %v38 = vld [vmem:[#allocation2 + $0x58] sm:$0xff]
    %v39 = vld [vmem:[#allocation2 + $0x60] sm:$0xff]
    %v40 = vld [vmem:[#allocation2 + $0x68] sm:$0xff]
    %v41 = vld [vmem:[#allocation2 + $0x70] sm:$0xff]
    %v42 = vld [vmem:[#allocation2 + $0x78] sm:$0xff]
    %v43 = vld [vmem:[%s1] sm:$0xff]
    %v44 = vld [vmem:[%s1 + $0x8] sm:$0xff]
    %vm45 = vcmask 130048
    %v47 = vsel %vm45, %v27, 0
    %v50 = vsel %vm45, %v28, 0
    %v53 = vsel %vm45, %v29, 0
    %v56 = vsel %vm45, %v30, 0
    %v59 = vsel %vm45, %v31, 0
    %v62 = vsel %vm45, %v32, 0
    %v65 = vsel %vm45, %v33, 0
    %v68 = vsel %vm45, %v34, 0
    %v71 = vsel %vm45, %v35, 0
    %v74 = vsel %vm45, %v36, 0
    %v77 = vsel %vm45, %v37, 0
    %v80 = vsel %vm45, %v38, 0
    %v83 = vsel %vm45, %v39, 0
    %v86 = vsel %vm45, %v40, 0
    %v89 = vsel %vm45, %v41, 0
    %v92 = vsel %vm45, %v42, 0
    %94 = vmatpush.msra.mxu0 0.0
    %95 = vmatpush.msra.mxu0 0.0
    %96 = vmatpush.msra.mxu0 0.0
    %97 = vmatpush.msra.mxu0 0.0
    %98 = vmatpush.msra.mxu0 0.0
    %99 = vmatpush.msra.mxu0 0.0
    %100 = vmatpush.msra.mxu0 0.0
    %101 = vmatpush.msra.mxu0 0.0
    %102 = vmatpush.msra.mxu0 0.0
    %103 = vmatpush.msra.mxu0 0.0
    %104 = vmatpush.msra.mxu0 0.0
    %105 = vmatpush.msra.mxu0 0.0
    %106 = vmatpush.msra.mxu0 0.0
    %107 = vmatpush.msra.mxu0 0.0
    %v108 = vand.u32 %v44, 4294901760
    %109 = vmatpush.msra.mxu0 %v108
    %v110 = vand.u32 %v43, 4294901760
    %111 = vmatpush.msra.mxu0 %v110
    %v112 = vand.u32 %v47, 4294901760
    %v113 = vsub.f32 %v47, %v112
    %v114 = vand.u32 %v113, 4294901760
    %v115 = vsub.f32 %v113, %v114
    %v116 = vand.u32 %v115, 4294901760
    %117 = vmatmul.f32.gmra.mxu0 %v116
    %v118 = vpop.f32.mrf.mxu0
    %v119 = vadd.f32 0.0, %v118
    %v120 = vand.u32 %v50, 4294901760
    %v121 = vsub.f32 %v50, %v120
    %v122 = vand.u32 %v121, 4294901760
    %v123 = vsub.f32 %v121, %v122
    %v124 = vand.u32 %v123, 4294901760
    %125 = vmatmul.f32.gmra.mxu0 %v124
    %v126 = vpop.f32.mrf.mxu0
    %v127 = vadd.f32 0.0, %v126
    %v128 = vand.u32 %v53, 4294901760
    %v129 = vsub.f32 %v53, %v128
    %v130 = vand.u32 %v129, 4294901760
    %v131 = vsub.f32 %v129, %v130
    %v132 = vand.u32 %v131, 4294901760
    %133 = vmatmul.f32.gmra.mxu0 %v132
    %v134 = vpop.f32.mrf.mxu0
    %v135 = vadd.f32 0.0, %v134
    %v136 = vand.u32 %v56, 4294901760
    %v137 = vsub.f32 %v56, %v136
    %v138 = vand.u32 %v137, 4294901760
    %v139 = vsub.f32 %v137, %v138
    %v140 = vand.u32 %v139, 4294901760
    %141 = vmatmul.f32.gmra.mxu0 %v140
    %v142 = vpop.f32.mrf.mxu0
    %v143 = vadd.f32 0.0, %v142
    %v144 = vand.u32 %v59, 4294901760
    %v145 = vsub.f32 %v59, %v144
    %v146 = vand.u32 %v145, 4294901760
    %v147 = vsub.f32 %v145, %v146
    %v148 = vand.u32 %v147, 4294901760
    %149 = vmatmul.f32.gmra.mxu0 %v148
    %v150 = vpop.f32.mrf.mxu0
    %v151 = vadd.f32 0.0, %v150
    %v152 = vand.u32 %v62, 4294901760
    %v153 = vsub.f32 %v62, %v152
    %v154 = vand.u32 %v153, 4294901760
    %v155 = vsub.f32 %v153, %v154
    %v156 = vand.u32 %v155, 4294901760
    %157 = vmatmul.f32.gmra.mxu0 %v156
    %v158 = vpop.f32.mrf.mxu0
    %v159 = vadd.f32 0.0, %v158
    %v160 = vand.u32 %v65, 4294901760
    %v161 = vsub.f32 %v65, %v160
    %v162 = vand.u32 %v161, 4294901760
    %v163 = vsub.f32 %v161, %v162
    %v164 = vand.u32 %v163, 4294901760
    %165 = vmatmul.f32.gmra.mxu0 %v164
    %v166 = vpop.f32.mrf.mxu0
    %v167 = vadd.f32 0.0, %v166
    %v168 = vand.u32 %v68, 4294901760
    %v169 = vsub.f32 %v68, %v168
    %v170 = vand.u32 %v169, 4294901760
    %v171 = vsub.f32 %v169, %v170
    %v172 = vand.u32 %v171, 4294901760
    %173 = vmatmul.f32.gmra.mxu0 %v172
    %v174 = vpop.f32.mrf.mxu0
    %v175 = vadd.f32 0.0, %v174
    %v176 = vand.u32 %v71, 4294901760
    %v177 = vsub.f32 %v71, %v176
    %v178 = vand.u32 %v177, 4294901760
    %v179 = vsub.f32 %v177, %v178
    %v180 = vand.u32 %v179, 4294901760
    %181 = vmatmul.f32.gmra.mxu0 %v180
    %v182 = vpop.f32.mrf.mxu0
    %v183 = vadd.f32 0.0, %v182
    %v184 = vand.u32 %v74, 4294901760
    %v185 = vsub.f32 %v74, %v184
    %v186 = vand.u32 %v185, 4294901760
    %v187 = vsub.f32 %v185, %v186
    %v188 = vand.u32 %v187, 4294901760
    %189 = vmatmul.f32.gmra.mxu0 %v188
    %v190 = vpop.f32.mrf.mxu0
    %v191 = vadd.f32 0.0, %v190
    %v192 = vand.u32 %v77, 4294901760
    %v193 = vsub.f32 %v77, %v192
    %v194 = vand.u32 %v193, 4294901760
    %v195 = vsub.f32 %v193, %v194
    %v196 = vand.u32 %v195, 4294901760
    %197 = vmatmul.f32.gmra.mxu0 %v196
    %v198 = vpop.f32.mrf.mxu0
    %v199 = vadd.f32 0.0, %v198
    %v200 = vand.u32 %v80, 4294901760
    %v201 = vsub.f32 %v80, %v200
    %v202 = vand.u32 %v201, 4294901760
    %v203 = vsub.f32 %v201, %v202
    %v204 = vand.u32 %v203, 4294901760
    %205 = vmatmul.f32.gmra.mxu0 %v204
    %v206 = vpop.f32.mrf.mxu0
    %v207 = vadd.f32 0.0, %v206
    %v208 = vand.u32 %v83, 4294901760
    %v209 = vsub.f32 %v83, %v208
    %v210 = vand.u32 %v209, 4294901760
    %v211 = vsub.f32 %v209, %v210
    %v212 = vand.u32 %v211, 4294901760
    %213 = vmatmul.f32.gmra.mxu0 %v212
    %v214 = vpop.f32.mrf.mxu0
    %v215 = vadd.f32 0.0, %v214
    %v216 = vand.u32 %v86, 4294901760
    %v217 = vsub.f32 %v86, %v216
    %v218 = vand.u32 %v217, 4294901760
    %v219 = vsub.f32 %v217, %v218
    %v220 = vand.u32 %v219, 4294901760
    %221 = vmatmul.f32.gmra.mxu0 %v220
    %v222 = vpop.f32.mrf.mxu0
    %v223 = vadd.f32 0.0, %v222
    %v224 = vand.u32 %v89, 4294901760
    %v225 = vsub.f32 %v89, %v224
    %v226 = vand.u32 %v225, 4294901760
    %v227 = vsub.f32 %v225, %v226
    %v228 = vand.u32 %v227, 4294901760
    %229 = vmatmul.f32.gmra.mxu0 %v228
    %v230 = vpop.f32.mrf.mxu0
    %v231 = vadd.f32 0.0, %v230
    %v232 = vand.u32 %v92, 4294901760
    %v233 = vsub.f32 %v92, %v232
    %v234 = vand.u32 %v233, 4294901760
    %v235 = vsub.f32 %v233, %v234
    %v236 = vand.u32 %v235, 4294901760
    %237 = vmatmul.f32.gmra.mxu0 %v236
    %v238 = vpop.f32.mrf.mxu0
    %v239 = vadd.f32 0.0, %v238
    %240 = vdwg.mxu0
    %241 = vmatpush.msra.mxu0 0.0
    %242 = vmatpush.msra.mxu0 0.0
    %243 = vmatpush.msra.mxu0 0.0
    %244 = vmatpush.msra.mxu0 0.0
    %245 = vmatpush.msra.mxu0 0.0
    %246 = vmatpush.msra.mxu0 0.0
    %247 = vmatpush.msra.mxu0 0.0
    %248 = vmatpush.msra.mxu0 0.0
    %249 = vmatpush.msra.mxu0 0.0
    %250 = vmatpush.msra.mxu0 0.0
    %251 = vmatpush.msra.mxu0 0.0
    %252 = vmatpush.msra.mxu0 0.0
    %253 = vmatpush.msra.mxu0 0.0
    %254 = vmatpush.msra.mxu0 0.0
    %v255 = vand.u32 %v44, 4294901760
    %v256 = vsub.f32 %v44, %v255
    %v257 = vand.u32 %v256, 4294901760
    %v258 = vsub.f32 %v256, %v257
    %v259 = vand.u32 %v258, 4294901760
    %260 = vmatpush.msra.mxu0 %v259
    %v261 = vand.u32 %v43, 4294901760
    %v262 = vsub.f32 %v43, %v261
    %v263 = vand.u32 %v262, 4294901760
    %v264 = vsub.f32 %v262, %v263
    %v265 = vand.u32 %v264, 4294901760
    %266 = vmatpush.msra.mxu0 %v265
    %v267 = vand.u32 %v47, 4294901760
    %268 = vmatmul.f32.gmra.mxu0 %v267
    %v269 = vpop.f32.mrf.mxu0
    %v270 = vadd.f32 %v119, %v269
    %v271 = vand.u32 %v50, 4294901760
    %272 = vmatmul.f32.gmra.mxu0 %v271
    %v273 = vpop.f32.mrf.mxu0
    %v274 = vadd.f32 %v127, %v273
    %v275 = vand.u32 %v53, 4294901760
    %276 = vmatmul.f32.gmra.mxu0 %v275
    %v277 = vpop.f32.mrf.mxu0
    %v278 = vadd.f32 %v135, %v277
    %v279 = vand.u32 %v56, 4294901760
    %280 = vmatmul.f32.gmra.mxu0 %v279
    %v281 = vpop.f32.mrf.mxu0
    %v282 = vadd.f32 %v143, %v281
    %v283 = vand.u32 %v59, 4294901760
    %284 = vmatmul.f32.gmra.mxu0 %v283
    %v285 = vpop.f32.mrf.mxu0
    %v286 = vadd.f32 %v151, %v285
    %v287 = vand.u32 %v62, 4294901760
    %288 = vmatmul.f32.gmra.mxu0 %v287
    %v289 = vpop.f32.mrf.mxu0
    %v290 = vadd.f32 %v159, %v289
    %v291 = vand.u32 %v65, 4294901760
    %292 = vmatmul.f32.gmra.mxu0 %v291
    %v293 = vpop.f32.mrf.mxu0
    %v294 = vadd.f32 %v167, %v293
    %v295 = vand.u32 %v68, 4294901760
    %296 = vmatmul.f32.gmra.mxu0 %v295
    %v297 = vpop.f32.mrf.mxu0
    %v298 = vadd.f32 %v175, %v297
    %v299 = vand.u32 %v71, 4294901760
    %300 = vmatmul.f32.gmra.mxu0 %v299
    %v301 = vpop.f32.mrf.mxu0
    %v302 = vadd.f32 %v183, %v301
    %v303 = vand.u32 %v74, 4294901760
    %304 = vmatmul.f32.gmra.mxu0 %v303
    %v305 = vpop.f32.mrf.mxu0
    %v306 = vadd.f32 %v191, %v305
    %v307 = vand.u32 %v77, 4294901760
    %308 = vmatmul.f32.gmra.mxu0 %v307
    %v309 = vpop.f32.mrf.mxu0
    %v310 = vadd.f32 %v199, %v309
    %v311 = vand.u32 %v80, 4294901760
    %312 = vmatmul.f32.gmra.mxu0 %v311
    %v313 = vpop.f32.mrf.mxu0
    %v314 = vadd.f32 %v207, %v313
    %v315 = vand.u32 %v83, 4294901760
    %316 = vmatmul.f32.gmra.mxu0 %v315
    %v317 = vpop.f32.mrf.mxu0
    %v318 = vadd.f32 %v215, %v317
    %v319 = vand.u32 %v86, 4294901760
    %320 = vmatmul.f32.gmra.mxu0 %v319
    %v321 = vpop.f32.mrf.mxu0
    %v322 = vadd.f32 %v223, %v321
    %v323 = vand.u32 %v89, 4294901760
    %324 = vmatmul.f32.gmra.mxu0 %v323
    %v325 = vpop.f32.mrf.mxu0
    %v326 = vadd.f32 %v231, %v325
    %v327 = vand.u32 %v92, 4294901760
    %328 = vmatmul.f32.gmra.mxu0 %v327
    %v329 = vpop.f32.mrf.mxu0
    %v330 = vadd.f32 %v239, %v329
    %331 = vdwg.mxu0
    %332 = vmatpush.msra.mxu0 0.0
    %333 = vmatpush.msra.mxu0 0.0
    %334 = vmatpush.msra.mxu0 0.0
    %335 = vmatpush.msra.mxu0 0.0
    %336 = vmatpush.msra.mxu0 0.0
    %337 = vmatpush.msra.mxu0 0.0
    %338 = vmatpush.msra.mxu0 0.0
    %339 = vmatpush.msra.mxu0 0.0
    %340 = vmatpush.msra.mxu0 0.0
    %341 = vmatpush.msra.mxu0 0.0
    %342 = vmatpush.msra.mxu0 0.0
    %343 = vmatpush.msra.mxu0 0.0
    %344 = vmatpush.msra.mxu0 0.0
    %345 = vmatpush.msra.mxu0 0.0
    %v346 = vand.u32 %v44, 4294901760
    %v347 = vsub.f32 %v44, %v346
    %348 = vmatpush.msra.mxu0 %v347
    %v349 = vand.u32 %v43, 4294901760
    %v350 = vsub.f32 %v43, %v349
    %351 = vmatpush.msra.mxu0 %v350
    %v352 = vand.u32 %v47, 4294901760
    %v353 = vsub.f32 %v47, %v352
    %354 = vmatmul.f32.gmra.mxu0 %v353
    %v355 = vpop.f32.mrf.mxu0
    %v356 = vadd.f32 %v270, %v355
    %v357 = vand.u32 %v50, 4294901760
    %v358 = vsub.f32 %v50, %v357
    %359 = vmatmul.f32.gmra.mxu0 %v358
    %v360 = vpop.f32.mrf.mxu0
    %v361 = vadd.f32 %v274, %v360
    %v362 = vand.u32 %v53, 4294901760
    %v363 = vsub.f32 %v53, %v362
    %364 = vmatmul.f32.gmra.mxu0 %v363
    %v365 = vpop.f32.mrf.mxu0
    %v366 = vadd.f32 %v278, %v365
    %v367 = vand.u32 %v56, 4294901760
    %v368 = vsub.f32 %v56, %v367
    %369 = vmatmul.f32.gmra.mxu0 %v368
    %v370 = vpop.f32.mrf.mxu0
    %v371 = vadd.f32 %v282, %v370
    %v372 = vand.u32 %v59, 4294901760
    %v373 = vsub.f32 %v59, %v372
    %374 = vmatmul.f32.gmra.mxu0 %v373
    %v375 = vpop.f32.mrf.mxu0
    %v376 = vadd.f32 %v286, %v375
    %v377 = vand.u32 %v62, 4294901760
    %v378 = vsub.f32 %v62, %v377
    %379 = vmatmul.f32.gmra.mxu0 %v378
    %v380 = vpop.f32.mrf.mxu0
    %v381 = vadd.f32 %v290, %v380
    %v382 = vand.u32 %v65, 4294901760
    %v383 = vsub.f32 %v65, %v382
    %384 = vmatmul.f32.gmra.mxu0 %v383
    %v385 = vpop.f32.mrf.mxu0
    %v386 = vadd.f32 %v294, %v385
    %v387 = vand.u32 %v68, 4294901760
    %v388 = vsub.f32 %v68, %v387
    %389 = vmatmul.f32.gmra.mxu0 %v388
    %v390 = vpop.f32.mrf.mxu0
    %v391 = vadd.f32 %v298, %v390
    %v392 = vand.u32 %v71, 4294901760
    %v393 = vsub.f32 %v71, %v392
    %394 = vmatmul.f32.gmra.mxu0 %v393
    %v395 = vpop.f32.mrf.mxu0
    %v396 = vadd.f32 %v302, %v395
    %v397 = vand.u32 %v74, 4294901760
    %v398 = vsub.f32 %v74, %v397
    %399 = vmatmul.f32.gmra.mxu0 %v398
    %v400 = vpop.f32.mrf.mxu0
    %v401 = vadd.f32 %v306, %v400
    %v402 = vand.u32 %v77, 4294901760
    %v403 = vsub.f32 %v77, %v402
    %404 = vmatmul.f32.gmra.mxu0 %v403
    %v405 = vpop.f32.mrf.mxu0
    %v406 = vadd.f32 %v310, %v405
    %v407 = vand.u32 %v80, 4294901760
    %v408 = vsub.f32 %v80, %v407
    %409 = vmatmul.f32.gmra.mxu0 %v408
    %v410 = vpop.f32.mrf.mxu0
    %v411 = vadd.f32 %v314, %v410
    %v412 = vand.u32 %v83, 4294901760
    %v413 = vsub.f32 %v83, %v412
    %414 = vmatmul.f32.gmra.mxu0 %v413
    %v415 = vpop.f32.mrf.mxu0
    %v416 = vadd.f32 %v318, %v415
    %v417 = vand.u32 %v86, 4294901760
    %v418 = vsub.f32 %v86, %v417
    %419 = vmatmul.f32.gmra.mxu0 %v418
    %v420 = vpop.f32.mrf.mxu0
    %v421 = vadd.f32 %v322, %v420
    %v422 = vand.u32 %v89, 4294901760
    %v423 = vsub.f32 %v89, %v422
    %424 = vmatmul.f32.gmra.mxu0 %v423
    %v425 = vpop.f32.mrf.mxu0
    %v426 = vadd.f32 %v326, %v425
    %v427 = vand.u32 %v92, 4294901760
    %v428 = vsub.f32 %v92, %v427
    %429 = vmatmul.f32.gmra.mxu0 %v428
    %v430 = vpop.f32.mrf.mxu0
    %v431 = vadd.f32 %v330, %v430
    %432 = vdwg.mxu0
    %433 = vmatpush.msra.mxu0 0.0
    %434 = vmatpush.msra.mxu0 0.0
    %435 = vmatpush.msra.mxu0 0.0
    %436 = vmatpush.msra.mxu0 0.0
    %437 = vmatpush.msra.mxu0 0.0
    %438 = vmatpush.msra.mxu0 0.0
    %439 = vmatpush.msra.mxu0 0.0
    %440 = vmatpush.msra.mxu0 0.0
    %441 = vmatpush.msra.mxu0 0.0
    %442 = vmatpush.msra.mxu0 0.0
    %443 = vmatpush.msra.mxu0 0.0
    %444 = vmatpush.msra.mxu0 0.0
    %445 = vmatpush.msra.mxu0 0.0
    %446 = vmatpush.msra.mxu0 0.0
    %v447 = vand.u32 %v44, 4294901760
    %448 = vmatpush.msra.mxu0 %v447
    %v449 = vand.u32 %v43, 4294901760
    %450 = vmatpush.msra.mxu0 %v449
    %v451 = vand.u32 %v47, 4294901760
    %v452 = vsub.f32 %v47, %v451
    %v453 = vand.u32 %v452, 4294901760
    %454 = vmatmul.f32.gmra.mxu0 %v453
    %v455 = vpop.f32.mrf.mxu0
    %v456 = vadd.f32 %v356, %v455
    %v457 = vand.u32 %v50, 4294901760
    %v458 = vsub.f32 %v50, %v457
    %v459 = vand.u32 %v458, 4294901760
    %460 = vmatmul.f32.gmra.mxu0 %v459
    %v461 = vpop.f32.mrf.mxu0
    %v462 = vadd.f32 %v361, %v461
    %v463 = vand.u32 %v53, 4294901760
    %v464 = vsub.f32 %v53, %v463
    %v465 = vand.u32 %v464, 4294901760
    %466 = vmatmul.f32.gmra.mxu0 %v465
    %v467 = vpop.f32.mrf.mxu0
    %v468 = vadd.f32 %v366, %v467
    %v469 = vand.u32 %v56, 4294901760
    %v470 = vsub.f32 %v56, %v469
    %v471 = vand.u32 %v470, 4294901760
    %472 = vmatmul.f32.gmra.mxu0 %v471
    %v473 = vpop.f32.mrf.mxu0
    %v474 = vadd.f32 %v371, %v473
    %v475 = vand.u32 %v59, 4294901760
    %v476 = vsub.f32 %v59, %v475
    %v477 = vand.u32 %v476, 4294901760
    %478 = vmatmul.f32.gmra.mxu0 %v477
    %v479 = vpop.f32.mrf.mxu0
    %v480 = vadd.f32 %v376, %v479
    %v481 = vand.u32 %v62, 4294901760
    %v482 = vsub.f32 %v62, %v481
    %v483 = vand.u32 %v482, 4294901760
    %484 = vmatmul.f32.gmra.mxu0 %v483
    %v485 = vpop.f32.mrf.mxu0
    %v486 = vadd.f32 %v381, %v485
    %v487 = vand.u32 %v65, 4294901760
    %v488 = vsub.f32 %v65, %v487
    %v489 = vand.u32 %v488, 4294901760
    %490 = vmatmul.f32.gmra.mxu0 %v489
    %v491 = vpop.f32.mrf.mxu0
    %v492 = vadd.f32 %v386, %v491
    %v493 = vand.u32 %v68, 4294901760
    %v494 = vsub.f32 %v68, %v493
    %v495 = vand.u32 %v494, 4294901760
    %496 = vmatmul.f32.gmra.mxu0 %v495
    %v497 = vpop.f32.mrf.mxu0
    %v498 = vadd.f32 %v391, %v497
    %v499 = vand.u32 %v71, 4294901760
    %v500 = vsub.f32 %v71, %v499
    %v501 = vand.u32 %v500, 4294901760
    %502 = vmatmul.f32.gmra.mxu0 %v501
    %v503 = vpop.f32.mrf.mxu0
    %v504 = vadd.f32 %v396, %v503
    %v505 = vand.u32 %v74, 4294901760
    %v506 = vsub.f32 %v74, %v505
    %v507 = vand.u32 %v506, 4294901760
    %508 = vmatmul.f32.gmra.mxu0 %v507
    %v509 = vpop.f32.mrf.mxu0
    %v510 = vadd.f32 %v401, %v509
    %v511 = vand.u32 %v77, 4294901760
    %v512 = vsub.f32 %v77, %v511
    %v513 = vand.u32 %v512, 4294901760
    %514 = vmatmul.f32.gmra.mxu0 %v513
    %v515 = vpop.f32.mrf.mxu0
    %v516 = vadd.f32 %v406, %v515
    %v517 = vand.u32 %v80, 4294901760
    %v518 = vsub.f32 %v80, %v517
    %v519 = vand.u32 %v518, 4294901760
    %520 = vmatmul.f32.gmra.mxu0 %v519
    %v521 = vpop.f32.mrf.mxu0
    %v522 = vadd.f32 %v411, %v521
    %v523 = vand.u32 %v83, 4294901760
    %v524 = vsub.f32 %v83, %v523
    %v525 = vand.u32 %v524, 4294901760
    %526 = vmatmul.f32.gmra.mxu0 %v525
    %v527 = vpop.f32.mrf.mxu0
    %v528 = vadd.f32 %v416, %v527
    %v529 = vand.u32 %v86, 4294901760
    %v530 = vsub.f32 %v86, %v529
    %v531 = vand.u32 %v530, 4294901760
    %532 = vmatmul.f32.gmra.mxu0 %v531
    %v533 = vpop.f32.mrf.mxu0
    %v534 = vadd.f32 %v421, %v533
    %v535 = vand.u32 %v89, 4294901760
    %v536 = vsub.f32 %v89, %v535
    %v537 = vand.u32 %v536, 4294901760
    %538 = vmatmul.f32.gmra.mxu0 %v537
    %v539 = vpop.f32.mrf.mxu0
    %v540 = vadd.f32 %v426, %v539
    %v541 = vand.u32 %v92, 4294901760
    %v542 = vsub.f32 %v92, %v541
    %v543 = vand.u32 %v542, 4294901760
    %544 = vmatmul.f32.gmra.mxu0 %v543
    %v545 = vpop.f32.mrf.mxu0
    %v546 = vadd.f32 %v431, %v545
    %547 = vdwg.mxu0
    %548 = vmatpush.msra.mxu0 0.0
    %549 = vmatpush.msra.mxu0 0.0
    %550 = vmatpush.msra.mxu0 0.0
    %551 = vmatpush.msra.mxu0 0.0
    %552 = vmatpush.msra.mxu0 0.0
    %553 = vmatpush.msra.mxu0 0.0
    %554 = vmatpush.msra.mxu0 0.0
    %555 = vmatpush.msra.mxu0 0.0
    %556 = vmatpush.msra.mxu0 0.0
    %557 = vmatpush.msra.mxu0 0.0
    %558 = vmatpush.msra.mxu0 0.0
    %559 = vmatpush.msra.mxu0 0.0
    %560 = vmatpush.msra.mxu0 0.0
    %561 = vmatpush.msra.mxu0 0.0
    %v562 = vand.u32 %v44, 4294901760
    %v563 = vsub.f32 %v44, %v562
    %v564 = vand.u32 %v563, 4294901760
    %565 = vmatpush.msra.mxu0 %v564
    %v566 = vand.u32 %v43, 4294901760
    %v567 = vsub.f32 %v43, %v566
    %v568 = vand.u32 %v567, 4294901760
    %569 = vmatpush.msra.mxu0 %v568
    %v570 = vand.u32 %v47, 4294901760
    %571 = vmatmul.f32.gmra.mxu0 %v570
    %v572 = vpop.f32.mrf.mxu0
    %v573 = vadd.f32 %v456, %v572
    %v574 = vand.u32 %v50, 4294901760
    %575 = vmatmul.f32.gmra.mxu0 %v574
    %v576 = vpop.f32.mrf.mxu0
    %v577 = vadd.f32 %v462, %v576
    %v578 = vand.u32 %v53, 4294901760
    %579 = vmatmul.f32.gmra.mxu0 %v578
    %v580 = vpop.f32.mrf.mxu0
    %v581 = vadd.f32 %v468, %v580
    %v582 = vand.u32 %v56, 4294901760
    %583 = vmatmul.f32.gmra.mxu0 %v582
    %v584 = vpop.f32.mrf.mxu0
    %v585 = vadd.f32 %v474, %v584
    %v586 = vand.u32 %v59, 4294901760
    %587 = vmatmul.f32.gmra.mxu0 %v586
    %v588 = vpop.f32.mrf.mxu0
    %v589 = vadd.f32 %v480, %v588
    %v590 = vand.u32 %v62, 4294901760
    %591 = vmatmul.f32.gmra.mxu0 %v590
    %v592 = vpop.f32.mrf.mxu0
    %v593 = vadd.f32 %v486, %v592
    %v594 = vand.u32 %v65, 4294901760
    %595 = vmatmul.f32.gmra.mxu0 %v594
    %v596 = vpop.f32.mrf.mxu0
    %v597 = vadd.f32 %v492, %v596
    %v598 = vand.u32 %v68, 4294901760
    %599 = vmatmul.f32.gmra.mxu0 %v598
    %v600 = vpop.f32.mrf.mxu0
    %v601 = vadd.f32 %v498, %v600
    %v602 = vand.u32 %v71, 4294901760
    %603 = vmatmul.f32.gmra.mxu0 %v602
    %v604 = vpop.f32.mrf.mxu0
    %v605 = vadd.f32 %v504, %v604
    %v606 = vand.u32 %v74, 4294901760
    %607 = vmatmul.f32.gmra.mxu0 %v606
    %v608 = vpop.f32.mrf.mxu0
    %v609 = vadd.f32 %v510, %v608
    %v610 = vand.u32 %v77, 4294901760
    %611 = vmatmul.f32.gmra.mxu0 %v610
    %v612 = vpop.f32.mrf.mxu0
    %v613 = vadd.f32 %v516, %v612
    %v614 = vand.u32 %v80, 4294901760
    %615 = vmatmul.f32.gmra.mxu0 %v614
    %v616 = vpop.f32.mrf.mxu0
    %v617 = vadd.f32 %v522, %v616
    %v618 = vand.u32 %v83, 4294901760
    %619 = vmatmul.f32.gmra.mxu0 %v618
    %v620 = vpop.f32.mrf.mxu0
    %v621 = vadd.f32 %v528, %v620
    %v622 = vand.u32 %v86, 4294901760
    %623 = vmatmul.f32.gmra.mxu0 %v622
    %v624 = vpop.f32.mrf.mxu0
    %v625 = vadd.f32 %v534, %v624
    %v626 = vand.u32 %v89, 4294901760
    %627 = vmatmul.f32.gmra.mxu0 %v626
    %v628 = vpop.f32.mrf.mxu0
    %v629 = vadd.f32 %v540, %v628
    %v630 = vand.u32 %v92, 4294901760
    %631 = vmatmul.f32.gmra.mxu0 %v630
    %v632 = vpop.f32.mrf.mxu0
    %v633 = vadd.f32 %v546, %v632
    %634 = vdwg.mxu0
    %635 = vmatpush.msra.mxu0 0.0
    %636 = vmatpush.msra.mxu0 0.0
    %637 = vmatpush.msra.mxu0 0.0
    %638 = vmatpush.msra.mxu0 0.0
    %639 = vmatpush.msra.mxu0 0.0
    %640 = vmatpush.msra.mxu0 0.0
    %641 = vmatpush.msra.mxu0 0.0
    %642 = vmatpush.msra.mxu0 0.0
    %643 = vmatpush.msra.mxu0 0.0
    %644 = vmatpush.msra.mxu0 0.0
    %645 = vmatpush.msra.mxu0 0.0
    %646 = vmatpush.msra.mxu0 0.0
    %647 = vmatpush.msra.mxu0 0.0
    %648 = vmatpush.msra.mxu0 0.0
    %v649 = vand.u32 %v44, 4294901760
    %650 = vmatpush.msra.mxu0 %v649
    %v651 = vand.u32 %v43, 4294901760
    %652 = vmatpush.msra.mxu0 %v651
    %v653 = vand.u32 %v47, 4294901760
    %654 = vmatmul.f32.gmra.mxu0 %v653
    %v655 = vpop.f32.mrf.mxu0
    %v656 = vadd.f32 %v573, %v655
    %v657 = vand.u32 %v50, 4294901760
    %658 = vmatmul.f32.gmra.mxu0 %v657
    %v659 = vpop.f32.mrf.mxu0
    %v660 = vadd.f32 %v577, %v659
    %v661 = vand.u32 %v53, 4294901760
    %662 = vmatmul.f32.gmra.mxu0 %v661
    %v663 = vpop.f32.mrf.mxu0
    %v664 = vadd.f32 %v581, %v663
    %v665 = vand.u32 %v56, 4294901760
    %666 = vmatmul.f32.gmra.mxu0 %v665
    %v667 = vpop.f32.mrf.mxu0
    %v668 = vadd.f32 %v585, %v667
    %v669 = vand.u32 %v59, 4294901760
    %670 = vmatmul.f32.gmra.mxu0 %v669
    %v671 = vpop.f32.mrf.mxu0
    %v672 = vadd.f32 %v589, %v671
    %v673 = vand.u32 %v62, 4294901760
    %674 = vmatmul.f32.gmra.mxu0 %v673
    %v675 = vpop.f32.mrf.mxu0
    %v676 = vadd.f32 %v593, %v675
    %v677 = vand.u32 %v65, 4294901760
    %678 = vmatmul.f32.gmra.mxu0 %v677
    %v679 = vpop.f32.mrf.mxu0
    %v680 = vadd.f32 %v597, %v679
    %v681 = vand.u32 %v68, 4294901760
    %682 = vmatmul.f32.gmra.mxu0 %v681
    %v683 = vpop.f32.mrf.mxu0
    %v684 = vadd.f32 %v601, %v683
    %v685 = vand.u32 %v71, 4294901760
    %686 = vmatmul.f32.gmra.mxu0 %v685
    %v687 = vpop.f32.mrf.mxu0
    %v688 = vadd.f32 %v605, %v687
    %v689 = vand.u32 %v74, 4294901760
    %690 = vmatmul.f32.gmra.mxu0 %v689
    %v691 = vpop.f32.mrf.mxu0
    %v692 = vadd.f32 %v609, %v691
    %v693 = vand.u32 %v77, 4294901760
    %694 = vmatmul.f32.gmra.mxu0 %v693
    %v695 = vpop.f32.mrf.mxu0
    %v696 = vadd.f32 %v613, %v695
    %v697 = vand.u32 %v80, 4294901760
    %698 = vmatmul.f32.gmra.mxu0 %v697
    %v699 = vpop.f32.mrf.mxu0
    %v700 = vadd.f32 %v617, %v699
    %v701 = vand.u32 %v83, 4294901760
    %702 = vmatmul.f32.gmra.mxu0 %v701
    %v703 = vpop.f32.mrf.mxu0
    %v704 = vadd.f32 %v621, %v703
    %v705 = vand.u32 %v86, 4294901760
    %706 = vmatmul.f32.gmra.mxu0 %v705
    %v707 = vpop.f32.mrf.mxu0
    %v708 = vadd.f32 %v625, %v707
    %v709 = vand.u32 %v89, 4294901760
    %710 = vmatmul.f32.gmra.mxu0 %v709
    %v711 = vpop.f32.mrf.mxu0
    %v712 = vadd.f32 %v629, %v711
    %v713 = vand.u32 %v92, 4294901760
    %714 = vmatmul.f32.gmra.mxu0 %v713
    %v715 = vpop.f32.mrf.mxu0
    %v716 = vadd.f32 %v633, %v715
    %717 = vdwg.mxu0
    %vm718 = vcmask 261120
    %719 = vst.msk [vmem:[%s2] sm:$0xff] %vm718, %v656
    %720 = vst.msk [vmem:[%s2 + $0x8] sm:$0xff] %vm718, %v660
    %721 = vst.msk [vmem:[%s2 + $0x10] sm:$0xff] %vm718, %v664
    %722 = vst.msk [vmem:[%s2 + $0x18] sm:$0xff] %vm718, %v668
    %723 = vst.msk [vmem:[%s2 + $0x20] sm:$0xff] %vm718, %v672
    %724 = vst.msk [vmem:[%s2 + $0x28] sm:$0xff] %vm718, %v676
    %725 = vst.msk [vmem:[%s2 + $0x30] sm:$0xff] %vm718, %v680
    %726 = vst.msk [vmem:[%s2 + $0x38] sm:$0xff] %vm718, %v684
    %727 = vst.msk [vmem:[%s2 + $0x40] sm:$0xff] %vm718, %v688
    %728 = vst.msk [vmem:[%s2 + $0x48] sm:$0xff] %vm718, %v692
    %729 = vst.msk [vmem:[%s2 + $0x50] sm:$0xff] %vm718, %v696
    %730 = vst.msk [vmem:[%s2 + $0x58] sm:$0xff] %vm718, %v700
    %731 = vst.msk [vmem:[%s2 + $0x60] sm:$0xff] %vm718, %v704
    %732 = vst.msk [vmem:[%s2 + $0x68] sm:$0xff] %vm718, %v708
    %733 = vst.msk [vmem:[%s2 + $0x70] sm:$0xff] %vm718, %v712
    %734 = vst.msk [vmem:[%s2 + $0x78] sm:$0xff] %vm718, %v716
    %751 = vrot.lane.b32.xlu0 %v656, 32
    %v752 = vpop.permute.xlu0 %751
    %753 = vrot.lane.b32.xlu0 %v660, 32
    %v754 = vpop.permute.xlu0 %753
    %755 = vrot.lane.b32.xlu0 %v664, 32
    %v756 = vpop.permute.xlu0 %755
    %757 = vrot.lane.b32.xlu0 %v668, 32
    %v758 = vpop.permute.xlu0 %757
    %759 = vrot.lane.b32.xlu0 %v672, 32
    %v760 = vpop.permute.xlu0 %759
    %761 = vrot.lane.b32.xlu0 %v676, 32
    %v762 = vpop.permute.xlu0 %761
    %763 = vrot.lane.b32.xlu0 %v680, 32
    %v764 = vpop.permute.xlu0 %763
    %765 = vrot.lane.b32.xlu0 %v684, 32
    %v766 = vpop.permute.xlu0 %765
    %767 = vrot.lane.b32.xlu0 %v688, 32
    %v768 = vpop.permute.xlu0 %767
    %769 = vrot.lane.b32.xlu0 %v692, 32
    %v770 = vpop.permute.xlu0 %769
    %771 = vrot.lane.b32.xlu0 %v696, 32
    %v772 = vpop.permute.xlu0 %771
    %773 = vrot.lane.b32.xlu0 %v700, 32
    %v774 = vpop.permute.xlu0 %773
    %775 = vrot.lane.b32.xlu0 %v704, 32
    %v776 = vpop.permute.xlu0 %775
    %777 = vrot.lane.b32.xlu0 %v708, 32
    %v778 = vpop.permute.xlu0 %777
    %779 = vrot.lane.b32.xlu0 %v712, 32
    %v780 = vpop.permute.xlu0 %779
    %781 = vrot.lane.b32.xlu0 %v716, 32
    %v782 = vpop.permute.xlu0 %781
    %vm799 = vcmask 523520
    %800 = vst.msk [vmem:[%s2] sm:$0xff] %vm799, %v752
    %801 = vst.msk [vmem:[%s2 + $0x8] sm:$0xff] %vm799, %v754
    %802 = vst.msk [vmem:[%s2 + $0x10] sm:$0xff] %vm799, %v756
    %803 = vst.msk [vmem:[%s2 + $0x18] sm:$0xff] %vm799, %v758
    %804 = vst.msk [vmem:[%s2 + $0x20] sm:$0xff] %vm799, %v760
    %805 = vst.msk [vmem:[%s2 + $0x28] sm:$0xff] %vm799, %v762
    %806 = vst.msk [vmem:[%s2 + $0x30] sm:$0xff] %vm799, %v764
    %807 = vst.msk [vmem:[%s2 + $0x38] sm:$0xff] %vm799, %v766
    %808 = vst.msk [vmem:[%s2 + $0x40] sm:$0xff] %vm799, %v768
    %809 = vst.msk [vmem:[%s2 + $0x48] sm:$0xff] %vm799, %v770
    %810 = vst.msk [vmem:[%s2 + $0x50] sm:$0xff] %vm799, %v772
    %811 = vst.msk [vmem:[%s2 + $0x58] sm:$0xff] %vm799, %v774
    %812 = vst.msk [vmem:[%s2 + $0x60] sm:$0xff] %vm799, %v776
    %813 = vst.msk [vmem:[%s2 + $0x68] sm:$0xff] %vm799, %v778
    %814 = vst.msk [vmem:[%s2 + $0x70] sm:$0xff] %vm799, %v780
    %815 = vst.msk [vmem:[%s2 + $0x78] sm:$0xff] %vm799, %v782
    // Predicated region
    $region14: #{upsample_nearest.1} parent=1 // pred_check
      _
    $region15: #{upsample_nearest.1} parent=1 // pred_check_branch
      %817 = sbr.rel (0) target = $region17
    $region16: #{upsample_nearest.1} parent=1 // pred_region
      _
    $region17: #{upsample_nearest.1} parent=1 // pred_fallthru
      _
    // Predicated region
    $region18: #{upsample_nearest.1} parent=1 // pred_check
      _
    $region19: #{upsample_nearest.1} parent=1 // pred_check_branch
      %819 = sbr.rel (0) target = $region21
    $region20: #{upsample_nearest.1} parent=1 // pred_region
      _
    $region21: #{upsample_nearest.1} parent=1 // pred_fallthru
      _
    %820 = vsyncpa [#allocation3], 1

</llo_original>
